<compile_context>
chip_gen: v7x
topology: tpu7x:2x2x1
jax: 0.10.0
libtpu: 0.0.40
codegen_flags: <defaults>
</compile_context>

<pallas_src>
import jax
import jax.numpy as jnp
from jax.experimental import pallas as pl
from jax.experimental.pallas import tpu as pltpu


def mlp_critic_kernel(x_ref, w1_ref, b1_ref, w2_ref, b2_ref, o_ref):
    # fc1: (TM, resSize) @ (resSize, ndh) on the MXU.  w1 arrives pre-cast to
    # bf16; only the per-step x tile is cast in-kernel.  f32 accumulation.
    h = jnp.dot(
        x_ref[...].astype(jnp.bfloat16),
        w1_ref[...],
        preferred_element_type=jnp.float32,
    )
    h = h + b1_ref[...]                       # (TM, ndh) + (1, ndh) broadcast, f32
    h = jnp.where(h > 0, h, 0.2 * h)          # LeakyReLU(0.2)

    # fc2 (ndh -> 1), emitted lane-dense as a (1, TM) row:  w2 (1, ndh) @ h^T.
    # Keeping the post-matmul math in f32 (no bf16 elementwise) is deliberate
    # for v5e, whose VPU/EUP have no bf16 path.
    out = jnp.dot(w2_ref[...], h.T, preferred_element_type=jnp.float32)  # (1, TM)

    o_ref[...] = (out + b2_ref[0, 0]).astype(o_ref.dtype)


def mlp_uncond_critic(x, w1, b1, w2, b2, *, tm=1024):
    """x: (B, resSize) f32; w1: (resSize, ndh) f32/bf16 (fc1.weight.T);
    b1: (1, ndh); w2: (1, ndh) (PyTorch fc2.weight layout); b2: (1, 1).
    Returns (B, 1) f32 (sigmoid intentionally not applied, as in the module)."""
    B, res_size = x.shape
    ndh = w1.shape[1]

    # One-time casts / reshapes (outside the kernel).
    w1 = w1.astype(jnp.bfloat16)
    b1 = b1.astype(jnp.float32).reshape(1, ndh)
    w2 = w2.astype(jnp.float32).reshape(1, ndh)
    b2 = b2.astype(jnp.float32).reshape(1, 1)

    # ---- batch-tile selection ------------------------------------------------
    # Keep the x double buffer under ~16 MiB so large-resSize configs still fit
    # v7x's 64 MiB VMEM (32 MiB scoped default) alongside the resident weights.
    tm = int(tm)
    tm_budget = max(128, ((16 << 20) // (2 * res_size * 4)) // 128 * 128)
    tm = max(128, min(tm, tm_budget))

    pad_rows = 0
    if B > tm:
        # Main path: many grid steps, tile is a multiple of 128 so both the
        # (tm, res) x block and the lane-dense (1, tm) output block are aligned.
        tm = (tm // 128) * 128
    elif B > 256:
        # Whole batch would fit one tile: still split into >= 2 grid steps so the
        # "parallel" axis can shard across v7x's two TensorCores (no-op v5e/v6e).
        tm = pl.cdiv(pl.cdiv(B, 2), 128) * 128
    else:
        # Tiny batch: a single block covering the whole (sublane-aligned) batch.
        tm = pl.cdiv(B, 8) * 8
        pad_rows = tm - B

    if pad_rows:
        # Tiny-batch path only (<= 7 extra rows); the large-batch path never pads.
        x = jnp.pad(x, ((0, pad_rows), (0, 0)))

    n_rows = B + pad_rows
    grid = (pl.cdiv(n_rows, tm),)

    # VMEM budget estimate (x double buffer + default-double-buffered residents).
    est_vmem = (2 * tm * res_size * 4      # x tile, f32, double-buffered
                + 2 * res_size * ndh * 2   # resident w1 (bf16)
                + 4 * ndh * 4              # b1 + w2 (f32)
                + 2 * tm * 4)              # (1, tm) output tile, double-buffered
    cp_kwargs = dict(dimension_semantics=("parallel",))
    if est_vmem > 12 * (1 << 20):
        cp_kwargs["vmem_limit_bytes"] = min(2 * est_vmem, 56 * (1 << 20))
    # Note: w1/b1/w2 have a constant index_map; if inspection ever shows they get
    # the default 2 buffers at large resSize/ndh, pipeline_mode=pl.Buffered(1)
    # would halve their footprint.  Irrelevant at small sizes, so left default.

    out = pl.pallas_call(
        mlp_critic_kernel,
        out_shape=jax.ShapeDtypeStruct((1, n_rows), jnp.float32),
        grid=grid,
        in_specs=[
            # x tile marches over the batch; weights/biases stay resident in VMEM.
            pl.BlockSpec((tm, res_size), lambda i: (i, 0)),
            pl.BlockSpec((res_size, ndh), lambda i: (0, 0)),
            pl.BlockSpec((1, ndh), lambda i: (0, 0)),
            pl.BlockSpec((1, ndh), lambda i: (0, 0)),
            # (1,1) scalar bias in SMEM, read as b2_ref[0, 0].
            pl.BlockSpec(memory_space=pltpu.MemorySpace.SMEM),
        ],
        # Lane-dense output: one (1, tm) row per grid step.
        out_specs=pl.BlockSpec((1, tm), lambda i: (0, i)),
        compiler_params=pltpu.CompilerParams(**cp_kwargs),
    )(x, w1, b1, w2, b2)

    return out[0, :B].reshape(B, 1)


def init_params(key, res_size, ndh):
    # Matches weights_init: Linear weights ~ N(0, 0.02), biases = 0.
    k1, k2 = jax.random.split(key)
    w1 = (0.02 * jax.random.normal(k1, (res_size, ndh))).astype(jnp.float32)  # fc1.weight.T
    b1 = jnp.zeros((1, ndh), jnp.float32)
    w2 = (0.02 * jax.random.normal(k2, (1, ndh))).astype(jnp.float32)         # fc2.weight
    b2 = jnp.zeros((1, 1), jnp.float32)
    return w1, b1, w2, b2


if __name__ == "__main__":
    # Small shapes consistent with the module (args.resSize = args.ndh = 128).
    RES_SIZE, NDH = 128, 128
    key = jax.random.PRNGKey(0)
    kp, kx1, kx2, kx3 = jax.random.split(key, 4)
    w1, b1, w2, b2 = init_params(kp, RES_SIZE, NDH)

    def ref_matched(x):
        # Same bf16-operand / f32-accumulate fc1 math as the kernel.
        h = jnp.dot(x.astype(jnp.bfloat16), w1.astype(jnp.bfloat16),
                    preferred_element_type=jnp.float32) + b1
        h = jnp.where(h > 0, h, 0.2 * h)
        return h @ w2.T + b2

    def ref_f32(x):
        h = x @ w1 + b1
        h = jnp.where(h > 0, h, 0.2 * h)
        return h @ w2.T + b2

    def check(x, out):
        assert out.shape == (x.shape[0], 1)
        r = ref_matched(x)
        assert jnp.allclose(out, r, atol=2e-3, rtol=2e-3), float(jnp.max(jnp.abs(out - r)))
        # Sanity vs a pure-f32 reference (bf16 fc1 operands are an intentional approx).
        assert jnp.allclose(out, ref_f32(x), atol=2e-2, rtol=2e-2)

    # Case 1: batch that auto-splits into 2 grid steps (v7x dual-TC path) with a
    # ragged, unpadded last block.
    x1 = jax.random.normal(kx1, (300, RES_SIZE), dtype=jnp.float32)
    out1 = jax.block_until_ready(mlp_uncond_critic(x1, w1, b1, w2, b2))
    check(x1, out1)

    # Case 2: explicit small tile -> 3-step main path, ragged last block, no pad.
    out2 = jax.block_until_ready(mlp_uncond_critic(x1, w1, b1, w2, b2, tm=128))
    check(x1, out2)

    # Case 3: tiny non-multiple-of-8 batch -> single-block path (pads 20 -> 24).
    x3 = jax.random.normal(kx3, (20, RES_SIZE), dtype=jnp.float32)
    out3 = jax.block_until_ready(mlp_uncond_critic(x3, w1, b1, w2, b2))
    check(x3, out3)

    print("KERNEL_OK")
</pallas_src>

<mosaic_0001>
module attributes {stable_mosaic.version = 11 : i64} {
  func.func @mlp_critic_kernel(%arg0: i32, %arg1: memref<256x128xf32, #tpu.memory_space<vmem>>, %arg2: memref<128x128xbf16, #tpu.memory_space<vmem>>, %arg3: memref<1x128xf32, #tpu.memory_space<vmem>>, %arg4: memref<1x128xf32, #tpu.memory_space<vmem>>, %arg5: memref<1x1xf32, #tpu.memory_space<smem>>, %arg6: memref<1x256xf32, #tpu.memory_space<vmem>>) attributes {dimension_semantics = [#tpu.dimension_semantics<parallel>], iteration_bounds = array<i64: 2>, scalar_prefetch = 0 : i64, scratch_operands = 0 : i64, tpu.core_type = #tpu.core_type<tc>, window_params = [{transform_indices = @transform_0, window_bounds = array<i64: 256, 128>}, {pipeline_mode = #tpu.pipeline_mode<synchronous>, transform_indices = @transform_1, window_bounds = array<i64: 128, 128>}, {pipeline_mode = #tpu.pipeline_mode<synchronous>, transform_indices = @transform_2, window_bounds = array<i64: 1, 128>}, {pipeline_mode = #tpu.pipeline_mode<synchronous>, transform_indices = @transform_3, window_bounds = array<i64: 1, 128>}, {transform_indices = @transform_4, window_bounds = array<i64: 1, 1>}, {transform_indices = @transform_5, window_bounds = array<i64: 1, 256>}]} {
    %c0 = arith.constant 0 : index
    %c0_0 = arith.constant 0 : index
    %0 = vector.load %arg1[%c0, %c0_0] : memref<256x128xf32, #tpu.memory_space<vmem>>, vector<256x128xf32>
    %1 = arith.truncf %0 : vector<256x128xf32> to vector<256x128xbf16>
    %c0_1 = arith.constant 0 : index
    %c0_2 = arith.constant 0 : index
    %2 = vector.load %arg2[%c0_1, %c0_2] : memref<128x128xbf16, #tpu.memory_space<vmem>>, vector<128x128xbf16>
    %cst = arith.constant dense<0.000000e+00> : vector<256x128xf32>
    %3 = tpu.matmul %1, %2, %cst {dimension_numbers = #tpu.dot_dimension_numbers<[1], [0], [0], [1], [0, 0, 1, 1], [], []>} : vector<256x128xbf16>, vector<128x128xbf16>, vector<256x128xf32> -> vector<256x128xf32>
    %c0_3 = arith.constant 0 : index
    %c0_4 = arith.constant 0 : index
    %4 = vector.load %arg3[%c0_3, %c0_4] : memref<1x128xf32, #tpu.memory_space<vmem>>, vector<1x128xf32>
    %5 = vector.broadcast %4 : vector<1x128xf32> to vector<256x128xf32>
    %6 = arith.addf %3, %5 : vector<256x128xf32>
    %cst_5 = arith.constant 0.000000e+00 : f32
    %7 = vector.broadcast %cst_5 : f32 to vector<256x128xf32>
    %8 = arith.cmpf ogt, %6, %7 : vector<256x128xf32>
    %cst_6 = arith.constant 2.000000e-01 : f32
    %9 = vector.broadcast %cst_6 : f32 to vector<256x128xf32>
    %10 = arith.mulf %9, %6 : vector<256x128xf32>
    %11 = arith.select %8, %6, %10 : vector<256x128xi1>, vector<256x128xf32>
    %c0_7 = arith.constant 0 : index
    %c0_8 = arith.constant 0 : index
    %12 = vector.load %arg4[%c0_7, %c0_8] : memref<1x128xf32, #tpu.memory_space<vmem>>, vector<1x128xf32>
    %13 = tpu.transpose %11, [1, 0] : vector<256x128xf32> -> vector<128x256xf32>
    %cst_9 = arith.constant dense<0.000000e+00> : vector<1x256xf32>
    %14 = tpu.matmul %12, %13, %cst_9 {dimension_numbers = #tpu.dot_dimension_numbers<[1], [0], [0], [1], [0, 0, 1, 1], [], []>} : vector<1x128xf32>, vector<128x256xf32>, vector<1x256xf32> -> vector<1x256xf32>
    %c0_10 = arith.constant 0 : index
    %c0_11 = arith.constant 0 : index
    %15 = memref.load %arg5[%c0_10, %c0_11] : memref<1x1xf32, #tpu.memory_space<smem>>
    %16 = vector.broadcast %15 : f32 to vector<1x256xf32>
    %17 = arith.addf %14, %16 : vector<1x256xf32>
    %c0_12 = arith.constant 0 : index
    %c0_13 = arith.constant 0 : index
    %18 = vector.load %arg6[%c0_12, %c0_13] : memref<1x256xf32, #tpu.memory_space<vmem>>, vector<1x256xf32>
    tpu.vector_store %arg6[%c0_12, %c0_13], %17 {strides = array<i32>} : memref<1x256xf32, #tpu.memory_space<vmem>>, vector<1x256xf32>,
    return
  }
  func.func @transform_0(%arg0: i32) -> (i32, i32) {
    %c0_i32 = arith.constant 0 : i32
    %c0_i32_0 = arith.constant 0 : i32
    return %arg0, %c0_i32 : i32, i32
  }
  func.func @transform_1(%arg0: i32) -> (i32, i32) {
    %c0_i32 = arith.constant 0 : i32
    %c0_i32_0 = arith.constant 0 : i32
    %c0_i32_1 = arith.constant 0 : i32
    return %c0_i32, %c0_i32_0 : i32, i32
  }
  func.func @transform_2(%arg0: i32) -> (i32, i32) {
    %c0_i32 = arith.constant 0 : i32
    %c0_i32_0 = arith.constant 0 : i32
    %c0_i32_1 = arith.constant 0 : i32
    return %c0_i32, %c0_i32_0 : i32, i32
  }
  func.func @transform_3(%arg0: i32) -> (i32, i32) {
    %c0_i32 = arith.constant 0 : i32
    %c0_i32_0 = arith.constant 0 : i32
    %c0_i32_1 = arith.constant 0 : i32
    return %c0_i32, %c0_i32_0 : i32, i32
  }
  func.func @transform_4(%arg0: i32) -> (i32, i32) {
    %c0_i32 = arith.constant 0 : i32
    %c0_i32_0 = arith.constant 0 : i32
    %c0_i32_1 = arith.constant 0 : i32
    return %c0_i32, %c0_i32_0 : i32, i32
  }
  func.func @transform_5(%arg0: i32) -> (i32, i32) {
    %c0_i32 = arith.constant 0 : i32
    %c0_i32_0 = arith.constant 0 : i32
    return %c0_i32, %arg0 : i32, i32
  }
}

</mosaic_0001>

<llo_original>
// kernel: tpu_custom_call.1
$region0: #{tpu_custom_call.1}
  #allocation0 [shape = 'u32[]', space=smem, size = 0x4, offset = 0x4, fixed_abs, tag = 'smem constant byte address 0x4 - core index']
  #allocation1 [shape = 'u32[144,128]{1,0:T(1,128)}', space=vmem, size = 0x12000, scoped, tag = 'internal scratch']
  #allocation2 [shape = 'f32[1,1]{1,0:T(1,128)S(6)}', space=smem, size = 0x200, scoped, tag = 'scoped memory for tpu_custom_call.1']
  %s0 = inlined_call_operand.hbm [shape: f32[300,128], index: 0, kind: input, shape index: {}]
  %s1 = inlined_call_operand.hbm [shape: bf16[128,128], index: 1, kind: input, shape index: {}]
  %s2 = inlined_call_operand.vmem [shape: f32[1,128], index: 2, kind: input, shape index: {}]
  %s3 = inlined_call_operand.vmem [shape: f32[1,128], index: 3, kind: input, shape index: {}]
  %s4 = inlined_call_operand.<no memory space> [shape: f32[1,1], index: 4, kind: input, shape index: {}]
  %s5 = inlined_call_operand.hbm [shape: f32[1,300], index: 5, kind: output, shape index: {}]
  %s6 = sld [smem:[#allocation0]]
  $region61: #{tpu_custom_call.1} parent=0
    _
  %s8 = ssub.s32 1, %s6
  %s9 = scalar_select 0, %s8, %s6
  %10 = sst [smem:[#allocation2]] %s4
  $region1: #{tpu_custom_call.1} parent=0
    #allocation3 [shape = 'u8[262144]{0}', space=vmem, size = 0x40000, scoped, tag = 'input window, operand 0']
    #allocation4 [shape = 's32[2]{0}', space=sflag, size = 0x8, scoped, tag = 'scoped memory for tpu_custom_call.1']
    #allocation5 [shape = 's32[2]{0}', space=sflag, size = 0x8, scoped, tag = 'scoped memory for tpu_custom_call.1']
    #allocation6 [shape = 'u8[32768]{0}', space=vmem, size = 0x8000, scoped, tag = 'input window, operand 1, single buffered']
    #allocation7 [shape = 's32[1]{0}', space=sflag, size = 0x4, scoped, tag = 'scoped memory for tpu_custom_call.1']
    #allocation8 [shape = 'u8[2048]{0}', space=vmem, size = 0x800, scoped, tag = 'output window, operand 0']
    %11 = vsyncpa [#allocation4], 0
    %s12 = scalar_lea.sflag [#allocation4], 1
    %13 = vsyncpa %s12, 0
    %14 = vsyncpa [#allocation7], 0
    %15 = vsyncpa [#allocation5], 0
    %s16 = scalar_lea.sflag [#allocation5], 1
    %17 = vsyncpa %s16, 0
    loop: start=0, step=1, limit=4
    $region2: #{tpu_custom_call.1} parent=1 // loop_pre_header
      _
    $region3: #{tpu_custom_call.1} parent=1 // loop_header
      %s19 = sphi 0, %s23
      %p20 = scmp.ge.s32.totalorder %s19, 4
      %s29 = sphi 0, %s31
      %s32 = sphi 0, %s29
      %s33 = sphi 0, %s32
      %s49 = sphi 0, %s33
      %s53 = sphi 0, %s53
      %s55 = sphi 0, %s53
      %s56 = sphi 0, %s55
      %s70 = sphi 0, %s56
      %s74 = sphi 0, %s74
      %s76 = sphi 0, %s74
      %s77 = sphi 0, %s76
      %s91 = sphi 0, %s77
      %s95 = sphi 0, %s95
      %s97 = sphi 0, %s95
      %s98 = sphi 0, %s97
      %s112 = sphi 0, %s98
      %s116 = sphi 0, %s116
      %s118 = sphi 0, %s116
      %s119 = sphi 0, %s118
      %s133 = sphi 0, %s119
      %s139 = sphi 0, %s141
      %s142 = sphi 0, %s139
      %s143 = sphi 0, %s142
      %s159 = sphi 0, %s143
    $region4: #{tpu_custom_call.1} parent=1 // loop_header_branch
      %22 = sbr.rel (%p20) target = $region8
    $region5: #{tpu_custom_call.1} parent=1 // loop_body
      %s24 = ssub.s32 %s19, 1
      %s25 = ssub.s32 %s19, 2
      %s26 = sadd.s32 %s19, 1
      %s27 = ssub.s32 %s19, %s26
      %p28 = scmp.eq.s32.totalorder %s27, 0
      %s30 = sadd.s32 %s29, 1
      %s31 = scalar_select %p28, %s29, %s30
      %p34 = pneg %p28
      %p35 = scmp.eq.s32.totalorder %s19, 1
      %p36 = por %p34, %p35
      %p37 = scmp.ne.s32.totalorder %s29, %s32
      %p38 = scmp.eq.s32.totalorder %s19, 0
      %p39 = por %p37, %p38
      %p40 = scmp.ne.s32.totalorder %s29, %s32
      %p41 = scmp.eq.s32.totalorder %s24, 1
      %p42 = por %p40, %p41
      %p43 = scmp.ne.s32.totalorder %s32, %s33
      %p44 = scmp.eq.s32.totalorder %s24, 0
      %p45 = por %p43, %p44
      %p46 = scmp.ne.s32.totalorder %s32, %s33
      %p47 = scmp.eq.s32.totalorder %s25, 1
      %p48 = por %p46, %p47
      %p50 = scmp.ne.s32.totalorder %s33, %s49
      %p51 = scmp.eq.s32.totalorder %s25, 0
      %p52 = por %p50, %p51
      %s54 = sadd.s32 %s53, 1
      %p57 = scmp.eq.s32.totalorder %s19, 1
      %p58 = scmp.ne.s32.totalorder %s53, %s55
      %p59 = scmp.eq.s32.totalorder %s19, 0
      %p60 = por %p58, %p59
      %p61 = scmp.ne.s32.totalorder %s53, %s55
      %p62 = scmp.eq.s32.totalorder %s24, 1
      %p63 = por %p61, %p62
      %p64 = scmp.ne.s32.totalorder %s55, %s56
      %p65 = scmp.eq.s32.totalorder %s24, 0
      %p66 = por %p64, %p65
      %p67 = scmp.ne.s32.totalorder %s55, %s56
      %p68 = scmp.eq.s32.totalorder %s25, 1
      %p69 = por %p67, %p68
      %p71 = scmp.ne.s32.totalorder %s56, %s70
      %p72 = scmp.eq.s32.totalorder %s25, 0
      %p73 = por %p71, %p72
      %s75 = sadd.s32 %s74, 1
      %p78 = scmp.eq.s32.totalorder %s19, 1
      %p79 = scmp.ne.s32.totalorder %s74, %s76
      %p80 = scmp.eq.s32.totalorder %s19, 0
      %p81 = por %p79, %p80
      %p82 = scmp.ne.s32.totalorder %s74, %s76
      %p83 = scmp.eq.s32.totalorder %s24, 1
      %p84 = por %p82, %p83
      %p85 = scmp.ne.s32.totalorder %s76, %s77
      %p86 = scmp.eq.s32.totalorder %s24, 0
      %p87 = por %p85, %p86
      %p88 = scmp.ne.s32.totalorder %s76, %s77
      %p89 = scmp.eq.s32.totalorder %s25, 1
      %p90 = por %p88, %p89
      %p92 = scmp.ne.s32.totalorder %s77, %s91
      %p93 = scmp.eq.s32.totalorder %s25, 0
      %p94 = por %p92, %p93
      %s96 = sadd.s32 %s95, 1
      %p99 = scmp.eq.s32.totalorder %s19, 1
      %p100 = scmp.ne.s32.totalorder %s95, %s97
      %p101 = scmp.eq.s32.totalorder %s19, 0
      %p102 = por %p100, %p101
      %p103 = scmp.ne.s32.totalorder %s95, %s97
      %p104 = scmp.eq.s32.totalorder %s24, 1
      %p105 = por %p103, %p104
      %p106 = scmp.ne.s32.totalorder %s97, %s98
      %p107 = scmp.eq.s32.totalorder %s24, 0
      %p108 = por %p106, %p107
      %p109 = scmp.ne.s32.totalorder %s97, %s98
      %p110 = scmp.eq.s32.totalorder %s25, 1
      %p111 = por %p109, %p110
      %p113 = scmp.ne.s32.totalorder %s98, %s112
      %p114 = scmp.eq.s32.totalorder %s25, 0
      %p115 = por %p113, %p114
      %s117 = sadd.s32 %s116, 1
      %p120 = scmp.eq.s32.totalorder %s19, 1
      %p121 = scmp.ne.s32.totalorder %s116, %s118
      %p122 = scmp.eq.s32.totalorder %s19, 0
      %p123 = por %p121, %p122
      %p124 = scmp.ne.s32.totalorder %s116, %s118
      %p125 = scmp.eq.s32.totalorder %s24, 1
      %p126 = por %p124, %p125
      %p127 = scmp.ne.s32.totalorder %s118, %s119
      %p128 = scmp.eq.s32.totalorder %s24, 0
      %p129 = por %p127, %p128
      %p130 = scmp.ne.s32.totalorder %s118, %s119
      %p131 = scmp.eq.s32.totalorder %s25, 1
      %p132 = por %p130, %p131
      %p134 = scmp.ne.s32.totalorder %s119, %s133
      %p135 = scmp.eq.s32.totalorder %s25, 0
      %p136 = por %p134, %p135
      %s137 = ssub.s32 %s19, %s26
      %p138 = scmp.eq.s32.totalorder %s137, 0
      %s140 = sadd.s32 %s139, 1
      %s141 = scalar_select %p138, %s139, %s140
      %p144 = pneg %p138
      %p145 = scmp.eq.s32.totalorder %s19, 1
      %p146 = por %p144, %p145
      %p147 = scmp.ne.s32.totalorder %s139, %s142
      %p148 = scmp.eq.s32.totalorder %s19, 0
      %p149 = por %p147, %p148
      %p150 = scmp.ne.s32.totalorder %s139, %s142
      %p151 = scmp.eq.s32.totalorder %s24, 1
      %p152 = por %p150, %p151
      %p153 = scmp.ne.s32.totalorder %s142, %s143
      %p154 = scmp.eq.s32.totalorder %s24, 0
      %p155 = por %p153, %p154
      %p156 = scmp.ne.s32.totalorder %s142, %s143
      %p157 = scmp.eq.s32.totalorder %s25, 1
      %p158 = por %p156, %p157
      %p160 = scmp.ne.s32.totalorder %s143, %s159
      %p161 = scmp.eq.s32.totalorder %s25, 0
      %p162 = por %p160, %p161
      %p163 = scmp.le.s32.totalorder 1, %s19
      %p164 = scmp.lt.s32.totalorder %s19, 3
      %p165 = pnand %p163, %p164
      %p166 = pneg %p165
      // Predicated region
      $region9: #{tpu_custom_call.1} parent=5 // pred_check
        _
      $region10: #{tpu_custom_call.1} parent=5 // pred_check_branch
        %168 = sbr.rel (%p165) target = $region12
      $region11: #{tpu_custom_call.1} parent=5 // pred_region
        %s169 = ssub.s32 %s19, 1
        // Predicated region
        $region13: #{tpu_custom_call.1} parent=11 // pred_check
          %p170 = pneg %p66
        $region14: #{tpu_custom_call.1} parent=11 // pred_check_branch
          %172 = sbr.rel (%p170) target = $region16
        $region15: #{tpu_custom_call.1} parent=11 // pred_region
          %s174 = ssub.s32 1024, 1024
          %175 = vsyncadd [#allocation7], %s174
          %s176 = sshll.u32 [#allocation6], 4
          %s177 = int_to_ptr.vmem [resolvable:$true] %s176
          %182 = dma.hbm_to_vmem [thread:$0]  %s1, 1024, %s177, [#allocation7], 64, 64, 4
        $region16: #{tpu_custom_call.1} parent=11 // pred_fallthru
          _
        // Predicated region
        $region17: #{tpu_custom_call.1} parent=11 // pred_check
          %p183 = pneg %p87
        $region18: #{tpu_custom_call.1} parent=11 // pred_check_branch
          %185 = sbr.rel (%p183) target = $region20
        $region19: #{tpu_custom_call.1} parent=11 // pred_region
          _
        $region20: #{tpu_custom_call.1} parent=11 // pred_fallthru
          _
        // Predicated region
        $region21: #{tpu_custom_call.1} parent=11 // pred_check
          %p186 = pneg %p108
        $region22: #{tpu_custom_call.1} parent=11 // pred_check_branch
          %188 = sbr.rel (%p186) target = $region24
        $region23: #{tpu_custom_call.1} parent=11 // pred_region
          _
        $region24: #{tpu_custom_call.1} parent=11 // pred_fallthru
          _
        // Predicated region
        $region25: #{tpu_custom_call.1} parent=11 // pred_check
          %p189 = pneg %p129
        $region26: #{tpu_custom_call.1} parent=11 // pred_check_branch
          %191 = sbr.rel (%p189) target = $region28
        $region27: #{tpu_custom_call.1} parent=11 // pred_region
          _
        $region28: #{tpu_custom_call.1} parent=11 // pred_fallthru
          _
      $region12: #{tpu_custom_call.1} parent=5 // pred_fallthru
        _
      %p192 = scmp.lt.s32.totalorder %s19, 2
      // Predicated region
      $region29: #{tpu_custom_call.1} parent=5 // pred_check
        %p193 = pneg %p192
      $region30: #{tpu_custom_call.1} parent=5 // pred_check_branch
        %195 = sbr.rel (%p193) target = $region32
      $region31: #{tpu_custom_call.1} parent=5 // pred_region
        // Predicated region
        $region33: #{tpu_custom_call.1} parent=31 // pred_check
          %p196 = pneg %p39
        $region34: #{tpu_custom_call.1} parent=31 // pred_check_branch
          %198 = sbr.rel (%p196) target = $region36
        $region35: #{tpu_custom_call.1} parent=31 // pred_region
          %s199 = sand.u32 %s29, 1
          %s200 = scalar_lea.sflag [#allocation4], %s199
          %s201 = sand.u32 %s29, 1
          %s202 = smul.addr %s201, 256
          %s203 = scalar_lea.vmem [#allocation3], %s202
          %s204 = smul.u32 32, %s19
          %s205 = ssub.s32 38, %s204
          %p206 = scmp.lt.s32.totalorder %s205, 32
          %s207 = scalar_select %p206, %s205, 32
          %s208 = smul.u32 128, %s207
          %s210 = ssub.s32 4096, %s208
          %211 = vsyncadd %s200, %s210
          %p212 = scmp.ne.s32.totalorder 0, %s208
          %s213 = smul.addr %s204, 128
          %s214 = scalar_lea.hbm %s0, %s213
          %s215 = smul.u32 8, %s207
          %s216 = sshll.u32 %s203, 4
          %s217 = int_to_ptr.vmem [resolvable:$true] %s216
          %s218 = sshll.u32 %s215, 4
          %222 = dma.hbm_to_vmem [thread:$0]  (%p212), %s214, %s218, %s217, %s200, 128, 128, 8
        $region36: #{tpu_custom_call.1} parent=31 // pred_fallthru
          _
      $region32: #{tpu_custom_call.1} parent=5 // pred_fallthru
        _
      %p223 = scmp.le.s32.totalorder 1, %s19
      %p224 = scmp.lt.s32.totalorder %s19, 3
      %p225 = pnand %p223, %p224
      %p226 = pneg %p225
      // Predicated region
      $region37: #{tpu_custom_call.1} parent=5 // pred_check
        _
      $region38: #{tpu_custom_call.1} parent=5 // pred_check_branch
        %228 = sbr.rel (%p225) target = $region40
      $region39: #{tpu_custom_call.1} parent=5 // pred_region
        %s229 = ssub.s32 %s19, 1
        %s230 = sand.u32 %s32, 1
        %s231 = scalar_lea.sflag [#allocation4], %s230
        %s232 = sand.u32 %s32, 1
        %s233 = smul.addr %s232, 256
        %s234 = scalar_lea.vmem [#allocation3], %s233
        // Predicated region
        $region41: #{tpu_custom_call.1} parent=39 // pred_check
          %p235 = pneg %p45
        $region42: #{tpu_custom_call.1} parent=39 // pred_check_branch
          %237 = sbr.rel (%p235) target = $region44
        $region43: #{tpu_custom_call.1} parent=39 // pred_region
          %238 = dma.done %s231, 4096
        $region44: #{tpu_custom_call.1} parent=39 // pred_fallthru
          _
        // Predicated region
        $region45: #{tpu_custom_call.1} parent=39 // pred_check
          %p239 = pneg %p66
        $region46: #{tpu_custom_call.1} parent=39 // pred_check_branch
          %241 = sbr.rel (%p239) target = $region48
        $region47: #{tpu_custom_call.1} parent=39 // pred_region
          %242 = dma.done [#allocation7], 1024
        $region48: #{tpu_custom_call.1} parent=39 // pred_fallthru
          _
        %s243 = sand.u32 %s32, 1
        %s244 = scalar_lea.sflag [#allocation4], %s243
        %s245 = sand.u32 %s32, 1
        %s246 = smul.addr %s245, 256
        %s247 = scalar_lea.vmem [#allocation3], %s246
        %p248 = pneg %p45
        %p249 = pneg %p42
        %p250 = pneg %p66
        %p251 = pneg %p63
        %p252 = pneg %p87
        %p253 = pneg %p84
        %p254 = pneg %p108
        %p255 = pneg %p105
        %p256 = pneg %p129
        %p257 = pneg %p126
        %p258 = pneg %p155
        %p259 = pneg %p152
        %s260 = sand.u32 %s142, 1
        %s261 = scalar_lea.sflag [#allocation5], %s260
        %s262 = sand.u32 %s142, 1
        %s263 = smul.addr %s262, 2
        %s264 = scalar_lea.vmem [#allocation8], %s263
        %s265 = smul.u32 32, %s24
        %s266 = ssub.s32 38, %s265
        %p267 = scmp.lt.s32.totalorder %s266, 32
        %s268 = scalar_select %p267, %s266, 32
        %s269 = smul.u32 128, %s268
        %s270 = smul.u32 2, %s24
        %s271 = ssub.s32 3, %s270
        %p272 = scmp.lt.s32.totalorder %s271, 2
        %s273 = scalar_select %p272, %s271, 2
        %s274 = smul.u32 16, %s273
        %v276 = vld [vmem:[%s234] sm:$0xff]
        %v277 = vld [vmem:[%s234 + $0x8] sm:$0xff]
        %v278 = vld [vmem:[%s234 + $0x10] sm:$0xff]
        %v279 = vld [vmem:[%s234 + $0x18] sm:$0xff]
        %v280 = vld [vmem:[%s234 + $0x20] sm:$0xff]
        %v281 = vld [vmem:[%s234 + $0x28] sm:$0xff]
        %v282 = vld [vmem:[%s234 + $0x30] sm:$0xff]
        %v283 = vld [vmem:[%s234 + $0x38] sm:$0xff]
        %v284 = vld [vmem:[%s234 + $0x40] sm:$0xff]
        %v285 = vld [vmem:[%s234 + $0x48] sm:$0xff]
        %v286 = vld [vmem:[%s234 + $0x50] sm:$0xff]
        %v287 = vld [vmem:[%s234 + $0x58] sm:$0xff]
        %v288 = vld [vmem:[%s234 + $0x60] sm:$0xff]
        %v289 = vld [vmem:[%s234 + $0x68] sm:$0xff]
        %v290 = vld [vmem:[%s234 + $0x70] sm:$0xff]
        %v291 = vld [vmem:[%s234 + $0x78] sm:$0xff]
        %v292 = vld [vmem:[%s234 + $0x80] sm:$0xff]
        %v293 = vld [vmem:[%s234 + $0x88] sm:$0xff]
        %v294 = vld [vmem:[%s234 + $0x90] sm:$0xff]
        %v295 = vld [vmem:[%s234 + $0x98] sm:$0xff]
        %v296 = vld [vmem:[%s234 + $0xa0] sm:$0xff]
        %v297 = vld [vmem:[%s234 + $0xa8] sm:$0xff]
        %v298 = vld [vmem:[%s234 + $0xb0] sm:$0xff]
        %v299 = vld [vmem:[%s234 + $0xb8] sm:$0xff]
        %v300 = vld [vmem:[%s234 + $0xc0] sm:$0xff]
        %v301 = vld [vmem:[%s234 + $0xc8] sm:$0xff]
        %v302 = vld [vmem:[%s234 + $0xd0] sm:$0xff]
        %v303 = vld [vmem:[%s234 + $0xd8] sm:$0xff]
        %v304 = vld [vmem:[%s234 + $0xe0] sm:$0xff]
        %v305 = vld [vmem:[%s234 + $0xe8] sm:$0xff]
        %v306 = vld [vmem:[%s234 + $0xf0] sm:$0xff]
        %v307 = vld [vmem:[%s234 + $0xf8] sm:$0xff]
        %v308 = vpack.c.bf16 %v277, %v276
        %v309 = vpack.c.bf16 %v279, %v278
        %v310 = vpack.c.bf16 %v281, %v280
        %v311 = vpack.c.bf16 %v283, %v282
        %v312 = vpack.c.bf16 %v285, %v284
        %v313 = vpack.c.bf16 %v287, %v286
        %v314 = vpack.c.bf16 %v289, %v288
        %v315 = vpack.c.bf16 %v291, %v290
        %v316 = vpack.c.bf16 %v293, %v292
        %v317 = vpack.c.bf16 %v295, %v294
        %v318 = vpack.c.bf16 %v297, %v296
        %v319 = vpack.c.bf16 %v299, %v298
        %v320 = vpack.c.bf16 %v301, %v300
        %v321 = vpack.c.bf16 %v303, %v302
        %v322 = vpack.c.bf16 %v305, %v304
        %v323 = vpack.c.bf16 %v307, %v306
        %v324 = vld [vmem:[#allocation6] sm:$0xf]
        %v325 = vld [vmem:[#allocation6 + $0x4] sm:$0xf]
        %v326 = vld [vmem:[#allocation6 + $0x8] sm:$0xf]
        %v327 = vld [vmem:[#allocation6 + $0xc] sm:$0xf]
        %v328 = vld [vmem:[#allocation6 + $0x10] sm:$0xf]
        %v329 = vld [vmem:[#allocation6 + $0x14] sm:$0xf]
        %v330 = vld [vmem:[#allocation6 + $0x18] sm:$0xf]
        %v331 = vld [vmem:[#allocation6 + $0x1c] sm:$0xf]
        %v332 = vld [vmem:[#allocation6 + $0x20] sm:$0xf]
        %v333 = vld [vmem:[#allocation6 + $0x24] sm:$0xf]
        %v334 = vld [vmem:[#allocation6 + $0x28] sm:$0xf]
        %v335 = vld [vmem:[#allocation6 + $0x2c] sm:$0xf]
        %v336 = vld [vmem:[#allocation6 + $0x30] sm:$0xf]
        %v337 = vld [vmem:[#allocation6 + $0x34] sm:$0xf]
        %v338 = vld [vmem:[#allocation6 + $0x38] sm:$0xf]
        %v339 = vld [vmem:[#allocation6 + $0x3c] sm:$0xf]
        %v340 = vld [vmem:[%s2] sm:$0x1]
        %v342 = vlaneseq
        %v343 = vshrl.u32 %v342, 7
        %v344 = vsub.s32 0, %v343
        %v345 = vrot.slane %v340, %v344
        %v363 = vunpack.c.l.b16 %v324
        %v364 = vunpack.c.l.b16 %v325
        %v365 = vunpack.c.l.b16 %v326
        %v366 = vunpack.c.l.b16 %v327
        %v367 = vunpack.c.l.b16 %v328
        %v368 = vunpack.c.l.b16 %v329
        %v369 = vunpack.c.l.b16 %v330
        %v370 = vunpack.c.l.b16 %v331
        %v371 = vunpack.c.l.b16 %v332
        %v372 = vunpack.c.l.b16 %v333
        %v373 = vunpack.c.l.b16 %v334
        %v374 = vunpack.c.l.b16 %v335
        %v375 = vunpack.c.l.b16 %v336
        %v376 = vunpack.c.l.b16 %v337
        %v377 = vunpack.c.l.b16 %v338
        %v378 = vunpack.c.l.b16 %v339
        %v379 = vpack.c.b16 %v364, %v363
        %v380 = vpack.c.b16 %v366, %v365
        %v381 = vpack.c.b16 %v368, %v367
        %v382 = vpack.c.b16 %v370, %v369
        %v383 = vpack.c.b16 %v372, %v371
        %v384 = vpack.c.b16 %v374, %v373
        %v385 = vpack.c.b16 %v376, %v375
        %v386 = vpack.c.b16 %v378, %v377
        %395 = vmatprep.subr.bf16.mxu0 0
        %396 = vmatpush1.bf16.msra.mxu0 %v379
        %397 = vmatprep.subr.bf16.mxu0 0
        %398 = vmatpush1.bf16.msra.mxu0 %v380
        %399 = vmatprep.subr.bf16.mxu0 0
        %400 = vmatpush1.bf16.msra.mxu0 %v381
        %401 = vmatprep.subr.bf16.mxu0 0
        %402 = vmatpush1.bf16.msra.mxu0 %v382
        %403 = vmatprep.subr.bf16.mxu0 0
        %404 = vmatpush1.bf16.msra.mxu0 %v383
        %405 = vmatprep.subr.bf16.mxu0 0
        %406 = vmatpush1.bf16.msra.mxu0 %v384
        %407 = vmatprep.subr.bf16.mxu0 0
        %408 = vmatpush1.bf16.msra.mxu0 %v385
        %409 = vmatprep.subr.bf16.mxu0 0
        %410 = vmatpush1.bf16.msra.mxu0 %v386
        %411 = vmatprep.subr.bf16.mxu0 0
        %412 = vmatpush1.bf16.msra.mxu0 0
        %413 = vmatprep.subr.bf16.mxu0 0
        %414 = vmatpush1.bf16.msra.mxu0 0
        %415 = vmatprep.subr.bf16.mxu0 0
        %416 = vmatpush1.bf16.msra.mxu0 0
        %417 = vmatprep.subr.bf16.mxu0 0
        %418 = vmatpush1.bf16.msra.mxu0 0
        %419 = vmatprep.subr.bf16.mxu0 0
        %420 = vmatpush1.bf16.msra.mxu0 0
        %421 = vmatprep.subr.bf16.mxu0 0
        %422 = vmatpush1.bf16.msra.mxu0 0
        %423 = vmatprep.subr.bf16.mxu0 0
        %424 = vmatpush1.bf16.msra.mxu0 0
        %425 = vmatprep.subr.bf16.mxu0 0
        %426 = vmatpush1.bf16.msra.mxu0 0
        %427 = vmatprep.mubr.bf16.mxu0 0
        %428 = vmatmul.mubr.bf16.gmra.mrb[0].mxu0 %v308
        %v429 = vpop.f32.mrb[0].mxu0
        %v430 = vadd.f32 %v345, %v429
        %v431 = vpop.f32.mrb[0].mxu0
        %v432 = vpop.f32.mrb[0].mxu0
        %v433 = vadd.f32 %v345, %v432
        %v434 = vpop.f32.mrb[0].mxu0
        %435 = vmatprep.mubr.bf16.mxu0 0
        %436 = vmatmul.mubr.bf16.gmra.mrb[0].mxu0 %v309
        %v437 = vpop.f32.mrb[0].mxu0
        %v438 = vadd.f32 %v345, %v437
        %v439 = vpop.f32.mrb[0].mxu0
        %v440 = vpop.f32.mrb[0].mxu0
        %v441 = vadd.f32 %v345, %v440
        %v442 = vpop.f32.mrb[0].mxu0
        %443 = vmatprep.mubr.bf16.mxu0 0
        %444 = vmatmul.mubr.bf16.gmra.mrb[0].mxu0 %v310
        %v445 = vpop.f32.mrb[0].mxu0
        %v446 = vadd.f32 %v345, %v445
        %v447 = vpop.f32.mrb[0].mxu0
        %v448 = vpop.f32.mrb[0].mxu0
        %v449 = vadd.f32 %v345, %v448
        %v450 = vpop.f32.mrb[0].mxu0
        %451 = vmatprep.mubr.bf16.mxu0 0
        %452 = vmatmul.mubr.bf16.gmra.mrb[0].mxu0 %v311
        %v453 = vpop.f32.mrb[0].mxu0
        %v454 = vadd.f32 %v345, %v453
        %v455 = vpop.f32.mrb[0].mxu0
        %v456 = vpop.f32.mrb[0].mxu0
        %v457 = vadd.f32 %v345, %v456
        %v458 = vpop.f32.mrb[0].mxu0
        %459 = vmatprep.mubr.bf16.mxu0 0
        %460 = vmatmul.mubr.bf16.gmra.mrb[0].mxu0 %v312
        %v461 = vpop.f32.mrb[0].mxu0
        %v462 = vadd.f32 %v345, %v461
        %v463 = vpop.f32.mrb[0].mxu0
        %v464 = vpop.f32.mrb[0].mxu0
        %v465 = vadd.f32 %v345, %v464
        %v466 = vpop.f32.mrb[0].mxu0
        %467 = vmatprep.mubr.bf16.mxu0 0
        %468 = vmatmul.mubr.bf16.gmra.mrb[0].mxu0 %v313
        %v469 = vpop.f32.mrb[0].mxu0
        %v470 = vadd.f32 %v345, %v469
        %v471 = vpop.f32.mrb[0].mxu0
        %v472 = vpop.f32.mrb[0].mxu0
        %v473 = vadd.f32 %v345, %v472
        %v474 = vpop.f32.mrb[0].mxu0
        %475 = vmatprep.mubr.bf16.mxu0 0
        %476 = vmatmul.mubr.bf16.gmra.mrb[0].mxu0 %v314
        %v477 = vpop.f32.mrb[0].mxu0
        %v478 = vadd.f32 %v345, %v477
        %v479 = vpop.f32.mrb[0].mxu0
        %v480 = vpop.f32.mrb[0].mxu0
        %v481 = vadd.f32 %v345, %v480
        %v482 = vpop.f32.mrb[0].mxu0
        %483 = vmatprep.mubr.bf16.mxu0 0
        %484 = vmatmul.mubr.bf16.gmra.mrb[0].mxu0 %v315
        %v485 = vpop.f32.mrb[0].mxu0
        %v486 = vadd.f32 %v345, %v485
        %v487 = vpop.f32.mrb[0].mxu0
        %v488 = vpop.f32.mrb[0].mxu0
        %v489 = vadd.f32 %v345, %v488
        %v490 = vpop.f32.mrb[0].mxu0
        %491 = vmatprep.mubr.bf16.mxu0 0
        %492 = vmatmul.mubr.bf16.gmra.mrb[0].mxu0 %v316
        %v493 = vpop.f32.mrb[0].mxu0
        %v494 = vadd.f32 %v345, %v493
        %v495 = vpop.f32.mrb[0].mxu0
        %v496 = vpop.f32.mrb[0].mxu0
        %v497 = vadd.f32 %v345, %v496
        %v498 = vpop.f32.mrb[0].mxu0
        %499 = vmatprep.mubr.bf16.mxu0 0
        %500 = vmatmul.mubr.bf16.gmra.mrb[0].mxu0 %v317
        %v501 = vpop.f32.mrb[0].mxu0
        %v502 = vadd.f32 %v345, %v501
        %v503 = vpop.f32.mrb[0].mxu0
        %v504 = vpop.f32.mrb[0].mxu0
        %v505 = vadd.f32 %v345, %v504
        %v506 = vpop.f32.mrb[0].mxu0
        %507 = vmatprep.mubr.bf16.mxu0 0
        %508 = vmatmul.mubr.bf16.gmra.mrb[0].mxu0 %v318
        %v509 = vpop.f32.mrb[0].mxu0
        %v510 = vadd.f32 %v345, %v509
        %v511 = vpop.f32.mrb[0].mxu0
        %v512 = vpop.f32.mrb[0].mxu0
        %v513 = vadd.f32 %v345, %v512
        %v514 = vpop.f32.mrb[0].mxu0
        %515 = vmatprep.mubr.bf16.mxu0 0
        %516 = vmatmul.mubr.bf16.gmra.mrb[0].mxu0 %v319
        %v517 = vpop.f32.mrb[0].mxu0
        %v518 = vadd.f32 %v345, %v517
        %v519 = vpop.f32.mrb[0].mxu0
        %v520 = vpop.f32.mrb[0].mxu0
        %v521 = vadd.f32 %v345, %v520
        %v522 = vpop.f32.mrb[0].mxu0
        %523 = vmatprep.mubr.bf16.mxu0 0
        %524 = vmatmul.mubr.bf16.gmra.mrb[0].mxu0 %v320
        %v525 = vpop.f32.mrb[0].mxu0
        %v526 = vadd.f32 %v345, %v525
        %v527 = vpop.f32.mrb[0].mxu0
        %v528 = vpop.f32.mrb[0].mxu0
        %v529 = vadd.f32 %v345, %v528
        %v530 = vpop.f32.mrb[0].mxu0
        %531 = vmatprep.mubr.bf16.mxu0 0
        %532 = vmatmul.mubr.bf16.gmra.mrb[0].mxu0 %v321
        %v533 = vpop.f32.mrb[0].mxu0
        %v534 = vadd.f32 %v345, %v533
        %v535 = vpop.f32.mrb[0].mxu0
        %v536 = vpop.f32.mrb[0].mxu0
        %v537 = vadd.f32 %v345, %v536
        %v538 = vpop.f32.mrb[0].mxu0
        %539 = vmatprep.mubr.bf16.mxu0 0
        %540 = vmatmul.mubr.bf16.gmra.mrb[0].mxu0 %v322
        %v541 = vpop.f32.mrb[0].mxu0
        %v542 = vadd.f32 %v345, %v541
        %v543 = vpop.f32.mrb[0].mxu0
        %v544 = vpop.f32.mrb[0].mxu0
        %v545 = vadd.f32 %v345, %v544
        %v546 = vpop.f32.mrb[0].mxu0
        %547 = vmatprep.mubr.bf16.mxu0 0
        %548 = vmatmul.mubr.bf16.gmra.mrb[0].mxu0 %v323
        %v549 = vpop.f32.mrb[0].mxu0
        %v550 = vadd.f32 %v345, %v549
        %v551 = vpop.f32.mrb[0].mxu0
        %v552 = vpop.f32.mrb[0].mxu0
        %v553 = vadd.f32 %v345, %v552
        %v554 = vpop.f32.mrb[0].mxu0
        %555 = vdwg.mxu0
        %vm556 = vcmp.gt.f32.partialorder %v430, 0.0
        %vm557 = vcmp.gt.f32.partialorder %v433, 0.0
        %vm558 = vcmp.gt.f32.partialorder %v438, 0.0
        %vm559 = vcmp.gt.f32.partialorder %v441, 0.0
        %vm560 = vcmp.gt.f32.partialorder %v446, 0.0
        %vm561 = vcmp.gt.f32.partialorder %v449, 0.0
        %vm562 = vcmp.gt.f32.partialorder %v454, 0.0
        %vm563 = vcmp.gt.f32.partialorder %v457, 0.0
        %vm564 = vcmp.gt.f32.partialorder %v462, 0.0
        %vm565 = vcmp.gt.f32.partialorder %v465, 0.0
        %vm566 = vcmp.gt.f32.partialorder %v470, 0.0
        %vm567 = vcmp.gt.f32.partialorder %v473, 0.0
        %vm568 = vcmp.gt.f32.partialorder %v478, 0.0
        %vm569 = vcmp.gt.f32.partialorder %v481, 0.0
        %vm570 = vcmp.gt.f32.partialorder %v486, 0.0
        %vm571 = vcmp.gt.f32.partialorder %v489, 0.0
        %vm572 = vcmp.gt.f32.partialorder %v494, 0.0
        %vm573 = vcmp.gt.f32.partialorder %v497, 0.0
        %vm574 = vcmp.gt.f32.partialorder %v502, 0.0
        %vm575 = vcmp.gt.f32.partialorder %v505, 0.0
        %vm576 = vcmp.gt.f32.partialorder %v510, 0.0
        %vm577 = vcmp.gt.f32.partialorder %v513, 0.0
        %vm578 = vcmp.gt.f32.partialorder %v518, 0.0
        %vm579 = vcmp.gt.f32.partialorder %v521, 0.0
        %vm580 = vcmp.gt.f32.partialorder %v526, 0.0
        %vm581 = vcmp.gt.f32.partialorder %v529, 0.0
        %vm582 = vcmp.gt.f32.partialorder %v534, 0.0
        %vm583 = vcmp.gt.f32.partialorder %v537, 0.0
        %vm584 = vcmp.gt.f32.partialorder %v542, 0.0
        %vm585 = vcmp.gt.f32.partialorder %v545, 0.0
        %vm586 = vcmp.gt.f32.partialorder %v550, 0.0
        %vm587 = vcmp.gt.f32.partialorder %v553, 0.0
        %v588 = vmul.f32 %v430, 0.2
        %v589 = vmul.f32 %v433, 0.2
        %v590 = vmul.f32 %v438, 0.2
        %v591 = vmul.f32 %v441, 0.2
        %v592 = vmul.f32 %v446, 0.2
        %v593 = vmul.f32 %v449, 0.2
        %v594 = vmul.f32 %v454, 0.2
        %v595 = vmul.f32 %v457, 0.2
        %v596 = vmul.f32 %v462, 0.2
        %v597 = vmul.f32 %v465, 0.2
        %v598 = vmul.f32 %v470, 0.2
        %v599 = vmul.f32 %v473, 0.2
        %v600 = vmul.f32 %v478, 0.2
        %v601 = vmul.f32 %v481, 0.2
        %v602 = vmul.f32 %v486, 0.2
        %v603 = vmul.f32 %v489, 0.2
        %v604 = vmul.f32 %v494, 0.2
        %v605 = vmul.f32 %v497, 0.2
        %v606 = vmul.f32 %v502, 0.2
        %v607 = vmul.f32 %v505, 0.2
        %v608 = vmul.f32 %v510, 0.2
        %v609 = vmul.f32 %v513, 0.2
        %v610 = vmul.f32 %v518, 0.2
        %v611 = vmul.f32 %v521, 0.2
        %v612 = vmul.f32 %v526, 0.2
        %v613 = vmul.f32 %v529, 0.2
        %v614 = vmul.f32 %v534, 0.2
        %v615 = vmul.f32 %v537, 0.2
        %v616 = vmul.f32 %v542, 0.2
        %v617 = vmul.f32 %v545, 0.2
        %v618 = vmul.f32 %v550, 0.2
        %v619 = vmul.f32 %v553, 0.2
        %v620 = vsel %vm556, %v430, %v588
        %v621 = vsel %vm557, %v433, %v589
        %v622 = vsel %vm558, %v438, %v590
        %v623 = vsel %vm559, %v441, %v591
        %v624 = vsel %vm560, %v446, %v592
        %v625 = vsel %vm561, %v449, %v593
        %v626 = vsel %vm562, %v454, %v594
        %v627 = vsel %vm563, %v457, %v595
        %v628 = vsel %vm564, %v462, %v596
        %v629 = vsel %vm565, %v465, %v597
        %v630 = vsel %vm566, %v470, %v598
        %v631 = vsel %vm567, %v473, %v599
        %v632 = vsel %vm568, %v478, %v600
        %v633 = vsel %vm569, %v481, %v601
        %v634 = vsel %vm570, %v486, %v602
        %v635 = vsel %vm571, %v489, %v603
        %v636 = vsel %vm572, %v494, %v604
        %v637 = vsel %vm573, %v497, %v605
        %v638 = vsel %vm574, %v502, %v606
        %v639 = vsel %vm575, %v505, %v607
        %v640 = vsel %vm576, %v510, %v608
        %v641 = vsel %vm577, %v513, %v609
        %v642 = vsel %vm578, %v518, %v610
        %v643 = vsel %vm579, %v521, %v611
        %v644 = vsel %vm580, %v526, %v612
        %v645 = vsel %vm581, %v529, %v613
        %v646 = vsel %vm582, %v534, %v614
        %v647 = vsel %vm583, %v537, %v615
        %v648 = vsel %vm584, %v542, %v616
        %v649 = vsel %vm585, %v545, %v617
        %v650 = vsel %vm586, %v550, %v618
        %v651 = vsel %vm587, %v553, %v619
        %v652 = vld [vmem:[%s3] sm:$0x1]
        %s653 = sld [smem:[#allocation2]]
        %v654 = vstv %s653
        %655 = vmatprep.subr.mxu0 0.0
        %656 = vmatpush1.xpose.msra.mxu0 %v620
        %657 = vmatprep.subr.mxu0 0.0
        %658 = vmatpush1.xpose.msra.mxu0 %v621
        %659 = vmatprep.subr.mxu0 0.0
        %660 = vmatpush1.xpose.msra.mxu0 %v622
        %661 = vmatprep.subr.mxu0 0.0
        %662 = vmatpush1.xpose.msra.mxu0 %v623
        %663 = vmatprep.subr.mxu0 0.0
        %664 = vmatpush1.xpose.msra.mxu0 %v624
        %665 = vmatprep.subr.mxu0 0.0
        %666 = vmatpush1.xpose.msra.mxu0 %v625
        %667 = vmatprep.subr.mxu0 0.0
        %668 = vmatpush1.xpose.msra.mxu0 %v626
        %669 = vmatprep.subr.mxu0 0.0
        %670 = vmatpush1.xpose.msra.mxu0 %v627
        %671 = vmatprep.subr.mxu0 0.0
        %672 = vmatpush1.xpose.msra.mxu0 %v628
        %673 = vmatprep.subr.mxu0 0.0
        %674 = vmatpush1.xpose.msra.mxu0 %v629
        %675 = vmatprep.subr.mxu0 0.0
        %676 = vmatpush1.xpose.msra.mxu0 %v630
        %677 = vmatprep.subr.mxu0 0.0
        %678 = vmatpush1.xpose.msra.mxu0 %v631
        %679 = vmatprep.subr.mxu0 0.0
        %680 = vmatpush1.xpose.msra.mxu0 %v632
        %681 = vmatprep.subr.mxu0 0.0
        %682 = vmatpush1.xpose.msra.mxu0 %v633
        %683 = vmatprep.subr.mxu0 0.0
        %684 = vmatpush1.xpose.msra.mxu0 %v634
        %685 = vmatprep.subr.mxu0 0.0
        %686 = vmatpush1.xpose.msra.mxu0 %v635
        %687 = vmatprep.subr.mxu0 0.0
        %688 = vmatpush1.xpose.msra.mxu0 %v636
        %689 = vmatprep.subr.mxu0 0.0
        %690 = vmatpush1.xpose.msra.mxu0 %v637
        %691 = vmatprep.subr.mxu0 0.0
        %692 = vmatpush1.xpose.msra.mxu0 %v638
        %693 = vmatprep.subr.mxu0 0.0
        %694 = vmatpush1.xpose.msra.mxu0 %v639
        %695 = vmatprep.subr.mxu0 0.0
        %696 = vmatpush1.xpose.msra.mxu0 %v640
        %697 = vmatprep.subr.mxu0 0.0
        %698 = vmatpush1.xpose.msra.mxu0 %v641
        %699 = vmatprep.subr.mxu0 0.0
        %700 = vmatpush1.xpose.msra.mxu0 %v642
        %701 = vmatprep.subr.mxu0 0.0
        %702 = vmatpush1.xpose.msra.mxu0 %v643
        %703 = vmatprep.subr.mxu0 0.0
        %704 = vmatpush1.xpose.msra.mxu0 %v644
        %705 = vmatprep.subr.mxu0 0.0
        %706 = vmatpush1.xpose.msra.mxu0 %v645
        %707 = vmatprep.subr.mxu0 0.0
        %708 = vmatpush1.xpose.msra.mxu0 %v646
        %709 = vmatprep.subr.mxu0 0.0
        %710 = vmatpush1.xpose.msra.mxu0 %v647
        %711 = vmatprep.subr.mxu0 0.0
        %712 = vmatpush1.xpose.msra.mxu0 %v648
        %713 = vmatprep.subr.mxu0 0.0
        %714 = vmatpush1.xpose.msra.mxu0 %v649
        %715 = vmatprep.subr.mxu0 0.0
        %716 = vmatpush1.xpose.msra.mxu0 %v650
        %717 = vmatprep.subr.mxu0 0.0
        %718 = vmatpush1.xpose.msra.mxu0 %v651
        %719 = vmatprep.mubr.f32.mxu0 0.0
        %720 = vmatmul.mubr.f32.gmra.mrb[0].mxu0 %v652
        %v721 = vpop.f32.mrb[0].mxu0
        %v722 = vadd.f32 %v654, %v721
        %v723 = vpop.f32.mrb[0].mxu0
        %v724 = vadd.f32 %v654, %v723
        %725 = vdwg.mxu0
        %v728 = vcombine.low %v722, %v724
        %v730 = vunpack.c.l.s4 1966171168
        %v731 = vunpack.c.0.s8 %v730
        %v732 = vlaneseq
        %v733 = vshrl.u32 %v732, 7
        %v734 = vsub.s32 %v731, %v733
        %v735 = vrot.slane %v728, %v734
        %v737 = vunpack.c.l.s4 1966171168
        %v738 = vunpack.c.0.s8 %v737
        %v739 = vlaneseq
        %v740 = vshrl.u32 %v739, 7
        %v741 = vsub.s32 %v738, %v740
        %v742 = vrot.slane %v735, %v741
        %v744 = vlaneseq
        %vm745 = vcmp.ge.s32.totalorder %v744, 0
        %vm746 = vcmp.lt.s32.totalorder %v744, 256
        %vm747 = vmand %vm745, %vm746
        %748 = vst.msk [vmem:[%s264] sm:$0x3] %vm747, %v742
        %s749 = sand.u32 %s142, 1
        %s750 = scalar_lea.sflag [#allocation5], %s749
        %s751 = sand.u32 %s142, 1
        %s752 = smul.addr %s751, 2
        %s753 = scalar_lea.vmem [#allocation8], %s752
        // Predicated region
        $region49: #{tpu_custom_call.1} parent=39 // pred_check
          %p754 = pneg %p152
        $region50: #{tpu_custom_call.1} parent=39 // pred_check_branch
          %756 = sbr.rel (%p754) target = $region52
        $region51: #{tpu_custom_call.1} parent=39 // pred_region
          %s757 = smul.u32 2, %s24
          %s758 = ssub.s32 3, %s757
          %p759 = scmp.lt.s32.totalorder %s758, 2
          %s760 = scalar_select %p759, %s758, 2
          %s761 = smul.u32 16, %s760
          %s763 = ssub.s32 32, %s761
          %764 = vsyncadd %s750, %s763
          %p765 = scmp.ne.s32.totalorder 0, %s761
          %s766 = smul.addr %s757, 16
          %s767 = scalar_lea.hbm %s5, %s766
          %s768 = sshll.u32 %s760, 4
          %s769 = sshll.u32 %s753, 4
          %s770 = int_to_ptr.vmem [resolvable:$true] %s769
          %772 = dma.vmem_to_hbm [thread:$0]  (%p765), %s770, %s768, %s767, %s750
        $region52: #{tpu_custom_call.1} parent=39 // pred_fallthru
          _
      $region40: #{tpu_custom_call.1} parent=5 // pred_fallthru
        _
      %p773 = scmp.le.s32.totalorder 2, %s19
      // Predicated region
      $region53: #{tpu_custom_call.1} parent=5 // pred_check
        %p774 = pneg %p773
      $region54: #{tpu_custom_call.1} parent=5 // pred_check_branch
        %776 = sbr.rel (%p774) target = $region56
      $region55: #{tpu_custom_call.1} parent=5 // pred_region
        %s777 = ssub.s32 %s19, 2
        // Predicated region
        $region57: #{tpu_custom_call.1} parent=55 // pred_check
          %p778 = pneg %p158
        $region58: #{tpu_custom_call.1} parent=55 // pred_check_branch
          %780 = sbr.rel (%p778) target = $region60
        $region59: #{tpu_custom_call.1} parent=55 // pred_region
          %s781 = sand.u32 %s143, 1
          %s782 = scalar_lea.sflag [#allocation5], %s781
          %s783 = sand.u32 %s143, 1
          %s784 = smul.addr %s783, 2
          %s785 = scalar_lea.vmem [#allocation8], %s784
          %786 = dma.done %s782, 32
        $region60: #{tpu_custom_call.1} parent=55 // pred_fallthru
          _
      $region56: #{tpu_custom_call.1} parent=5 // pred_fallthru
        _
    $region6: #{tpu_custom_call.1} parent=1 // loop_footer
      %s23 = sadd.s32 1, %s19
    $region7: #{tpu_custom_call.1} parent=1 // loop_footer_branch
      %18 = sbr.rel target = $region3
    $region8: #{tpu_custom_call.1} parent=1 // loop_exit
      _
    %787 = vsyncpa [#allocation4], 1
    %s788 = scalar_lea.sflag [#allocation4], 1
    %789 = vsyncpa %s788, 1
    %790 = vsyncpa [#allocation7], 1
    %791 = vsyncpa [#allocation5], 1
    %s792 = scalar_lea.sflag [#allocation5], 1
    %793 = vsyncpa %s792, 1

</llo_original>
